<compile_context>
chip_gen: v7x
topology: tpu7x:2x2x1
jax: 0.10.0
libtpu: 0.0.40
codegen_flags: <defaults>
</compile_context>

<pallas_src>
import jax
import jax.numpy as jnp
from jax import lax
from jax.experimental import pallas as pl
from jax.experimental.pallas import tpu as pltpu

IN_CH = 4
OUT_CH = 64
KSIZE = 5
PAD = 2
POOL_K = 3
POOL_S = 2
BN_EPS = 1e-5
KPAD = 128          # per-batch contraction depth (25*Cin=100 padded to 128)


# ----------------------------- fused kernel ----------------------------------

def _pate_fused_kernel(lhs_ref, rhs_ref, gamma_ref, beta_ref, o_ref):
    """conv5x5("same") -> maxpool3x3/2 -> batchnorm (training stats), fused.

    lhs_ref:   (H*W, N*KPAD)   bf16  im2col patches, batch folded into K blocks,
                                     rows pre-ordered as (h%2, h//2, w%2, w//2)
    rhs_ref:   (N*KPAD, N*Cout) bf16 block-diagonal conv weights
    gamma_ref: (1, Cout) f32
    beta_ref:  (1, Cout) f32
    o_ref:     (OH, OW, N*Cout) f32  lane-dense pooled+normalized output,
                                     lane = n*Cout + c
    """
    OH, OW, L = o_ref.shape
    Cout = gamma_ref.shape[1]
    nb = L // Cout                       # batch size folded into lanes
    H2, W2 = OH + 1, OW + 1              # H//2, W//2

    # ---- conv: ONE deep-K matmul on the MXU, f32 accumulation ---------------
    conv = jnp.dot(lhs_ref[...], rhs_ref[...],
                   preferred_element_type=jnp.float32)        # (H*W, L)

    # rows are ordered (hp, hh, wp, wh) = (h%2, h//2, w%2, w//2) -> free reshape
    c5 = conv.reshape(2, H2, 2, W2, L)

    # ---- max-pool 3x3 stride 2 ----------------------------------------------
    # W direction: window start w=2b covers (wp=0,wh=b),(wp=1,wh=b),(wp=0,wh=b+1)
    #   -> whole-block selects + contiguous sublane slices (no strided gathers).
    wm = jnp.maximum(jnp.maximum(c5[:, :, 0, 0:OW, :], c5[:, :, 1, 0:OW, :]),
                     c5[:, :, 0, 1:OW + 1, :])                # (2, H2, OW, L)
    # H direction: same trick on the leading (block-granular) dims.
    pooled = jnp.maximum(jnp.maximum(wm[0, 0:OH], wm[1, 0:OH]),
                         wm[0, 1:OH + 1])                     # (OH, OW, L)

    # ---- batch-norm (training statistics, single pass) ----------------------
    cnt = jnp.float32(nb * OH * OW)
    t1 = jnp.sum(pooled, axis=(0, 1), keepdims=True)          # (1, 1, L)
    t2 = jnp.sum(pooled * pooled, axis=(0, 1), keepdims=True)
    s1 = t1[:, :, 0:Cout]
    s2 = t2[:, :, 0:Cout]
    for n in range(1, nb):                                    # combine lane halves
        s1 = s1 + t1[:, :, n * Cout:(n + 1) * Cout]
        s2 = s2 + t2[:, :, n * Cout:(n + 1) * Cout]
    mean = s1 / cnt
    var = s2 / cnt - mean * mean
    inv = lax.rsqrt(var + BN_EPS)
    gamma = gamma_ref[...].reshape(1, 1, Cout)
    beta = beta_ref[...].reshape(1, 1, Cout)
    scale = inv * gamma                                        # (1, 1, Cout)
    shift = beta - mean * scale
    scale_l = jnp.concatenate([scale] * nb, axis=-1)           # (1, 1, L)
    shift_l = jnp.concatenate([shift] * nb, axis=-1)

    # ---- lane-dense store (128 lanes, only valid pool columns) --------------
    o_ref[...] = pooled * scale_l + shift_l


# ----------------------------- wrapper ----------------------------------------

def pate_feature_pallas(x_nchw, w_oihw, b, gamma, beta):
    """Forward pass of pate_model.feature.  Returns NCHW output.

    `b` (conv bias) is accepted for API parity but unused: it is exactly
    cancelled by the training-mode BN mean subtraction after max-pool.
    """
    del b
    N, Cin, H, W = x_nchw.shape
    Cout = w_oihw.shape[0]
    assert H % 2 == 0 and W % 2 == 0, "kernel assumes even spatial size"
    OH = (H - POOL_K) // POOL_S + 1
    OW = (W - POOL_K) // POOL_S + 1
    K = KSIZE * KSIZE * Cin                   # 100
    assert K <= KPAD

    # ---- wrapper-side im2col: pure layout plumbing (no compute hoisting) ----
    x_nhwc = jnp.transpose(x_nchw, (0, 2, 3, 1))
    xpad = jnp.pad(x_nhwc, ((0, 0), (PAD, PAD), (PAD, PAD), (0, 0)))
    taps = [xpad[:, kh:kh + H, kw:kw + W, :]
            for kh in range(KSIZE) for kw in range(KSIZE)]
    pat = jnp.stack(taps, axis=3).reshape(N, H, W, K)   # K = (kh*5+kw)*Cin + ci
    # pre-deinterleave rows into (h%2, h//2, w%2, w//2) so the in-kernel pool
    # needs only block selects + contiguous sublane slices.
    pat = pat.reshape(N, H // 2, 2, W // 2, 2, K)
    pat = jnp.transpose(pat, (0, 2, 1, 4, 3, 5)).reshape(N, H * W, K)
    pat = jnp.pad(pat, ((0, 0), (0, 0), (0, KPAD - K)))
    lhs = jnp.concatenate([pat[n] for n in range(N)],
                          axis=1).astype(jnp.bfloat16)          # (H*W, N*KPAD)

    # block-diagonal RHS folds the batch into the matmul's output-lane dim.
    wmat = jnp.transpose(w_oihw, (2, 3, 1, 0)).reshape(K, Cout)  # (kh,kw,ci)-major
    wpad = jnp.pad(wmat, ((0, KPAD - K), (0, 0)))                # (KPAD, Cout)
    rhs = jnp.zeros((N * KPAD, N * Cout), jnp.float32)
    for n in range(N):
        rhs = rhs.at[n * KPAD:(n + 1) * KPAD, n * Cout:(n + 1) * Cout].set(wpad)
    rhs = rhs.astype(jnp.bfloat16)

    g2 = gamma.reshape(1, Cout).astype(jnp.float32)
    b2 = beta.reshape(1, Cout).astype(jnp.float32)

    cost = pl.CostEstimate(
        flops=2 * (H * W) * (N * KPAD) * (N * Cout),
        transcendentals=Cout,
        bytes_accessed=(lhs.size * 2 + rhs.size * 2
                        + (g2.size + b2.size) * 4 + OH * OW * N * Cout * 4))

    out = pl.pallas_call(
        _pate_fused_kernel,
        out_shape=jax.ShapeDtypeStruct((OH, OW, N * Cout), jnp.float32),
        grid=(1,),
        in_specs=[
            pl.BlockSpec((H * W, N * KPAD), lambda i: (0, 0)),
            pl.BlockSpec((N * KPAD, N * Cout), lambda i: (0, 0)),
            pl.BlockSpec((1, Cout), lambda i: (0, 0)),
            pl.BlockSpec((1, Cout), lambda i: (0, 0)),
        ],
        out_specs=pl.BlockSpec((OH, OW, N * Cout), lambda i: (0, 0, 0)),
        cost_estimate=cost,
        compiler_params=pltpu.CompilerParams(dimension_semantics=("arbitrary",)),
    )(lhs, rhs, g2, b2)

    # Free layout plumbing on a ~12 KB array: unfold batch from lanes -> NCHW.
    o = out.reshape(OH, OW, N, Cout)
    return jnp.transpose(o, (2, 3, 0, 1))                       # (N, Cout, OH, OW)


# ----------------------------- pure-JAX reference -----------------------------

def pate_feature_ref(x_nchw, w_oihw, b, gamma, beta):
    conv = lax.conv_general_dilated(
        x_nchw, w_oihw, window_strides=(1, 1),
        padding=((PAD, PAD), (PAD, PAD)),
        dimension_numbers=("NCHW", "OIHW", "NCHW"))
    conv = conv + b.reshape(1, -1, 1, 1)
    pooled = lax.reduce_window(conv, -jnp.inf, lax.max,
                               (1, 1, POOL_K, POOL_K),
                               (1, 1, POOL_S, POOL_S), "VALID")
    mean = jnp.mean(pooled, axis=(0, 2, 3), keepdims=True)
    var = jnp.mean((pooled - mean) ** 2, axis=(0, 2, 3), keepdims=True)
    y = (pooled - mean) * lax.rsqrt(var + BN_EPS)
    return y * gamma.reshape(1, -1, 1, 1) + beta.reshape(1, -1, 1, 1)


# ----------------------------- main --------------------------------------------

if __name__ == "__main__":
    key = jax.random.PRNGKey(0)
    kx, kw, kb = jax.random.split(key, 3)

    N, H, W = 2, 16, 16
    x = jax.random.normal(kx, (N, IN_CH, H, W), dtype=jnp.float32)

    # synthetic parameters (shapes from nn.Conv2d(in_ch, 64, 5, 1, padding=2))
    w = jax.random.normal(kw, (OUT_CH, IN_CH, KSIZE, KSIZE), dtype=jnp.float32) * 0.1
    b = jax.random.normal(kb, (OUT_CH,), dtype=jnp.float32) * 0.1
    gamma = jnp.ones((OUT_CH,), jnp.float32)   # BatchNorm2d affine weight init
    beta = jnp.zeros((OUT_CH,), jnp.float32)   # BatchNorm2d affine bias init

    out = pate_feature_pallas(x, w, b, gamma, beta)   # NCHW (2, 64, 7, 7)
    jax.block_until_ready(out)

    ref = pate_feature_ref(x, w, b, gamma, beta)
    err = float(jnp.max(jnp.abs(out - ref)))
    if err > 5e-2:
        raise AssertionError(f"mismatch vs reference: max abs err {err}")

    print("KERNEL_OK")
</pallas_src>

<mosaic_0001>
module attributes {stable_mosaic.version = 11 : i64} {
  func.func @_pate_fused_kernel(%arg0: i32, %arg1: memref<256x256xbf16, #tpu.memory_space<vmem>>, %arg2: memref<256x128xbf16, #tpu.memory_space<vmem>>, %arg3: memref<1x64xf32, #tpu.memory_space<vmem>>, %arg4: memref<1x64xf32, #tpu.memory_space<vmem>>, %arg5: memref<7x7x128xf32, #tpu.memory_space<vmem>>) attributes {dimension_semantics = [#tpu.dimension_semantics<arbitrary>], iteration_bounds = array<i64: 1>, scalar_prefetch = 0 : i64, scratch_operands = 0 : i64, tpu.core_type = #tpu.core_type<tc>, window_params = [{pipeline_mode = #tpu.pipeline_mode<synchronous>, transform_indices = @transform_0, window_bounds = array<i64: 256, 256>}, {pipeline_mode = #tpu.pipeline_mode<synchronous>, transform_indices = @transform_1, window_bounds = array<i64: 256, 128>}, {pipeline_mode = #tpu.pipeline_mode<synchronous>, transform_indices = @transform_2, window_bounds = array<i64: 1, 64>}, {pipeline_mode = #tpu.pipeline_mode<synchronous>, transform_indices = @transform_3, window_bounds = array<i64: 1, 64>}, {pipeline_mode = #tpu.pipeline_mode<synchronous>, transform_indices = @transform_4, window_bounds = array<i64: 7, 7, 128>}]} {
    %c0 = arith.constant 0 : index
    %c0_0 = arith.constant 0 : index
    %0 = vector.load %arg1[%c0, %c0_0] : memref<256x256xbf16, #tpu.memory_space<vmem>>, vector<256x256xbf16>
    %c0_1 = arith.constant 0 : index
    %c0_2 = arith.constant 0 : index
    %1 = vector.load %arg2[%c0_1, %c0_2] : memref<256x128xbf16, #tpu.memory_space<vmem>>, vector<256x128xbf16>
    %cst = arith.constant dense<0.000000e+00> : vector<256x128xf32>
    %2 = tpu.matmul %0, %1, %cst {dimension_numbers = #tpu.dot_dimension_numbers<[1], [0], [0], [1], [0, 0, 1, 1], [], []>} : vector<256x256xbf16>, vector<256x128xbf16>, vector<256x128xf32> -> vector<256x128xf32>
    %3 = vector.shape_cast %2 : vector<256x128xf32> to vector<2x8x2x8x128xf32>
    %4 = vector.extract_strided_slice %3 {offsets = [0, 0, 0, 0, 0], sizes = [2, 8, 1, 7, 128], strides = [1, 1, 1, 1, 1]} : vector<2x8x2x8x128xf32> to vector<2x8x1x7x128xf32>
    %5 = vector.shape_cast %4 : vector<2x8x1x7x128xf32> to vector<2x8x7x128xf32>
    %6 = vector.extract_strided_slice %3 {offsets = [0, 0, 1, 0, 0], sizes = [2, 8, 1, 7, 128], strides = [1, 1, 1, 1, 1]} : vector<2x8x2x8x128xf32> to vector<2x8x1x7x128xf32>
    %7 = vector.shape_cast %6 : vector<2x8x1x7x128xf32> to vector<2x8x7x128xf32>
    %8 = arith.maximumf %5, %7 : vector<2x8x7x128xf32>
    %9 = vector.extract_strided_slice %3 {offsets = [0, 0, 0, 1, 0], sizes = [2, 8, 1, 7, 128], strides = [1, 1, 1, 1, 1]} : vector<2x8x2x8x128xf32> to vector<2x8x1x7x128xf32>
    %10 = vector.shape_cast %9 : vector<2x8x1x7x128xf32> to vector<2x8x7x128xf32>
    %11 = arith.maximumf %8, %10 : vector<2x8x7x128xf32>
    %12 = vector.extract_strided_slice %11 {offsets = [0, 0, 0, 0], sizes = [1, 7, 7, 128], strides = [1, 1, 1, 1]} : vector<2x8x7x128xf32> to vector<1x7x7x128xf32>
    %13 = vector.shape_cast %12 : vector<1x7x7x128xf32> to vector<7x7x128xf32>
    %14 = vector.extract_strided_slice %11 {offsets = [1, 0, 0, 0], sizes = [1, 7, 7, 128], strides = [1, 1, 1, 1]} : vector<2x8x7x128xf32> to vector<1x7x7x128xf32>
    %15 = vector.shape_cast %14 : vector<1x7x7x128xf32> to vector<7x7x128xf32>
    %16 = arith.maximumf %13, %15 : vector<7x7x128xf32>
    %17 = vector.extract_strided_slice %11 {offsets = [0, 1, 0, 0], sizes = [1, 7, 7, 128], strides = [1, 1, 1, 1]} : vector<2x8x7x128xf32> to vector<1x7x7x128xf32>
    %18 = vector.shape_cast %17 : vector<1x7x7x128xf32> to vector<7x7x128xf32>
    %19 = arith.maximumf %16, %18 : vector<7x7x128xf32>
    %cst_3 = arith.constant dense<0.000000e+00> : vector<128xf32>
    %20 = vector.multi_reduction <add>, %19, %cst_3 [0, 1] : vector<7x7x128xf32> to vector<128xf32>
    %21 = vector.shape_cast %20 : vector<128xf32> to vector<1x1x128xf32>
    %22 = arith.mulf %19, %19 : vector<7x7x128xf32>
    %cst_4 = arith.constant dense<0.000000e+00> : vector<128xf32>
    %23 = vector.multi_reduction <add>, %22, %cst_4 [0, 1] : vector<7x7x128xf32> to vector<128xf32>
    %24 = vector.shape_cast %23 : vector<128xf32> to vector<1x1x128xf32>
    %25 = vector.extract_strided_slice %21 {offsets = [0, 0, 0], sizes = [1, 1, 64], strides = [1, 1, 1]} : vector<1x1x128xf32> to vector<1x1x64xf32>
    %26 = vector.extract_strided_slice %24 {offsets = [0, 0, 0], sizes = [1, 1, 64], strides = [1, 1, 1]} : vector<1x1x128xf32> to vector<1x1x64xf32>
    %27 = vector.extract_strided_slice %21 {offsets = [0, 0, 64], sizes = [1, 1, 64], strides = [1, 1, 1]} : vector<1x1x128xf32> to vector<1x1x64xf32>
    %28 = arith.addf %25, %27 : vector<1x1x64xf32>
    %29 = vector.extract_strided_slice %24 {offsets = [0, 0, 64], sizes = [1, 1, 64], strides = [1, 1, 1]} : vector<1x1x128xf32> to vector<1x1x64xf32>
    %30 = arith.addf %26, %29 : vector<1x1x64xf32>
    %cst_5 = arith.constant 9.800000e+01 : f32
    %31 = vector.broadcast %cst_5 : f32 to vector<1x1x64xf32>
    %32 = arith.divf %28, %31 : vector<1x1x64xf32>
    %cst_6 = arith.constant 9.800000e+01 : f32
    %33 = vector.broadcast %cst_6 : f32 to vector<1x1x64xf32>
    %34 = arith.divf %30, %33 : vector<1x1x64xf32>
    %35 = arith.mulf %32, %32 : vector<1x1x64xf32>
    %36 = arith.subf %34, %35 : vector<1x1x64xf32>
    %cst_7 = arith.constant 9.99999974E-6 : f32
    %37 = vector.broadcast %cst_7 : f32 to vector<1x1x64xf32>
    %38 = arith.addf %36, %37 : vector<1x1x64xf32>
    %39 = math.rsqrt %38 : vector<1x1x64xf32>
    %c0_8 = arith.constant 0 : index
    %c0_9 = arith.constant 0 : index
    %40 = vector.load %arg3[%c0_8, %c0_9] : memref<1x64xf32, #tpu.memory_space<vmem>>, vector<1x64xf32>
    %41 = vector.shape_cast %40 : vector<1x64xf32> to vector<1x1x64xf32>
    %c0_10 = arith.constant 0 : index
    %c0_11 = arith.constant 0 : index
    %42 = vector.load %arg4[%c0_10, %c0_11] : memref<1x64xf32, #tpu.memory_space<vmem>>, vector<1x64xf32>
    %43 = vector.shape_cast %42 : vector<1x64xf32> to vector<1x1x64xf32>
    %44 = arith.mulf %39, %41 : vector<1x1x64xf32>
    %45 = arith.mulf %32, %44 : vector<1x1x64xf32>
    %46 = arith.subf %43, %45 : vector<1x1x64xf32>
    %47 = tpu.concatenate %44, %44 in 2 : vector<1x1x64xf32>, vector<1x1x64xf32> -> vector<1x1x128xf32>
    %48 = tpu.concatenate %46, %46 in 2 : vector<1x1x64xf32>, vector<1x1x64xf32> -> vector<1x1x128xf32>
    %49 = vector.broadcast %47 : vector<1x1x128xf32> to vector<7x7x128xf32>
    %50 = arith.mulf %19, %49 : vector<7x7x128xf32>
    %51 = vector.broadcast %48 : vector<1x1x128xf32> to vector<7x7x128xf32>
    %52 = arith.addf %50, %51 : vector<7x7x128xf32>
    %c0_12 = arith.constant 0 : index
    %c0_13 = arith.constant 0 : index
    %c0_14 = arith.constant 0 : index
    %53 = vector.load %arg5[%c0_12, %c0_13, %c0_14] : memref<7x7x128xf32, #tpu.memory_space<vmem>>, vector<7x7x128xf32>
    tpu.vector_store %arg5[%c0_12, %c0_13, %c0_14], %52 {strides = array<i32>} : memref<7x7x128xf32, #tpu.memory_space<vmem>>, vector<7x7x128xf32>,
    return
  }
  func.func @transform_0(%arg0: i32) -> (i32, i32) {
    %c0_i32 = arith.constant 0 : i32
    %c0_i32_0 = arith.constant 0 : i32
    %c0_i32_1 = arith.constant 0 : i32
    return %c0_i32, %c0_i32_0 : i32, i32
  }
  func.func @transform_1(%arg0: i32) -> (i32, i32) {
    %c0_i32 = arith.constant 0 : i32
    %c0_i32_0 = arith.constant 0 : i32
    %c0_i32_1 = arith.constant 0 : i32
    return %c0_i32, %c0_i32_0 : i32, i32
  }
  func.func @transform_2(%arg0: i32) -> (i32, i32) {
    %c0_i32 = arith.constant 0 : i32
    %c0_i32_0 = arith.constant 0 : i32
    %c0_i32_1 = arith.constant 0 : i32
    return %c0_i32, %c0_i32_0 : i32, i32
  }
  func.func @transform_3(%arg0: i32) -> (i32, i32) {
    %c0_i32 = arith.constant 0 : i32
    %c0_i32_0 = arith.constant 0 : i32
    %c0_i32_1 = arith.constant 0 : i32
    return %c0_i32, %c0_i32_0 : i32, i32
  }
  func.func @transform_4(%arg0: i32) -> (i32, i32, i32) {
    %c0_i32 = arith.constant 0 : i32
    %c0_i32_0 = arith.constant 0 : i32
    %c0_i32_1 = arith.constant 0 : i32
    %c0_i32_2 = arith.constant 0 : i32
    return %c0_i32, %c0_i32_0, %c0_i32_1 : i32, i32, i32
  }
}

</mosaic_0001>

<llo_original>
// kernel: tpu_custom_call.1
$region0: #{tpu_custom_call.1}
  #allocation0 [shape = 'u32[]', space=smem, size = 0x4, offset = 0x4, fixed_abs, tag = 'smem constant byte address 0x4 - core index']
  #allocation1 [shape = 'u32[144,128]{1,0:T(1,128)}', space=vmem, size = 0x12000, scoped, tag = 'internal scratch']
  %s0 = inlined_call_operand.hbm [shape: bf16[256,256], index: 0, kind: input, shape index: {}]
  %s1 = inlined_call_operand.hbm [shape: bf16[256,128], index: 1, kind: input, shape index: {}]
  %s2 = inlined_call_operand.vmem [shape: f32[1,64], index: 2, kind: input, shape index: {}]
  %s3 = inlined_call_operand.vmem [shape: f32[1,64], index: 3, kind: input, shape index: {}]
  %s4 = inlined_call_operand.hbm [shape: f32[7,7,128], index: 4, kind: output, shape index: {}]
  %s5 = sld [smem:[#allocation0]]
  $region34: #{tpu_custom_call.1} parent=0
    _
  %s7 = ssub.s32 1, %s5
  %s8 = scalar_select 0, %s7, %s5
  $region1: #{tpu_custom_call.1} parent=0
    #allocation2 [shape = 'u8[131072]{0}', space=vmem, size = 0x20000, scoped, tag = 'input window, operand 0, single buffered']
    #allocation3 [shape = 's32[1]{0}', space=sflag, size = 0x4, scoped, tag = 'scoped memory for tpu_custom_call.1']
    #allocation4 [shape = 's32[1]{0}', space=sflag, size = 0x4, scoped, tag = 'scoped memory for tpu_custom_call.1']
    #allocation5 [shape = 'u8[65536]{0}', space=vmem, size = 0x10000, scoped, tag = 'input window, operand 1, single buffered']
    #allocation6 [shape = 's32[1]{0}', space=sflag, size = 0x4, scoped, tag = 'scoped memory for tpu_custom_call.1']
    #allocation7 [shape = 'u8[28672]{0}', space=vmem, size = 0x7000, scoped, tag = 'output window, operand 0, single buffered']
    %9 = vsyncpa [#allocation3], 0
    %10 = vsyncpa [#allocation6], 0
    %11 = vsyncpa [#allocation4], 0
    // Predicated region
    $region2: #{tpu_custom_call.1} parent=1 // pred_check
      _
    $region3: #{tpu_custom_call.1} parent=1 // pred_check_branch
      %13 = sbr.rel (0) target = $region5
    $region4: #{tpu_custom_call.1} parent=1 // pred_region
      %s15 = ssub.s32 4096, 4096
      %16 = vsyncadd [#allocation3], %s15
      %s17 = sshll.u32 [#allocation2], 4
      %s18 = int_to_ptr.vmem [resolvable:$true] %s17
      %23 = dma.hbm_to_vmem [thread:$0]  %s0, 4096, %s18, [#allocation3], 128, 128, 8
    $region5: #{tpu_custom_call.1} parent=1 // pred_fallthru
      _
    // Predicated region
    $region6: #{tpu_custom_call.1} parent=1 // pred_check
      _
    $region7: #{tpu_custom_call.1} parent=1 // pred_check_branch
      %25 = sbr.rel (0) target = $region9
    $region8: #{tpu_custom_call.1} parent=1 // pred_region
      %s27 = ssub.s32 2048, 2048
      %28 = vsyncadd [#allocation6], %s27
      %s29 = sshll.u32 [#allocation5], 4
      %s30 = int_to_ptr.vmem [resolvable:$true] %s29
      %35 = dma.hbm_to_vmem [thread:$0]  %s1, 2048, %s30, [#allocation6], 64, 64, 4
    $region9: #{tpu_custom_call.1} parent=1 // pred_fallthru
      _
    // Predicated region
    $region10: #{tpu_custom_call.1} parent=1 // pred_check
      _
    $region11: #{tpu_custom_call.1} parent=1 // pred_check_branch
      %37 = sbr.rel (0) target = $region13
    $region12: #{tpu_custom_call.1} parent=1 // pred_region
      _
    $region13: #{tpu_custom_call.1} parent=1 // pred_fallthru
      _
    // Predicated region
    $region14: #{tpu_custom_call.1} parent=1 // pred_check
      _
    $region15: #{tpu_custom_call.1} parent=1 // pred_check_branch
      %39 = sbr.rel (0) target = $region17
    $region16: #{tpu_custom_call.1} parent=1 // pred_region
      _
    $region17: #{tpu_custom_call.1} parent=1 // pred_fallthru
      _
    // Predicated region
    $region18: #{tpu_custom_call.1} parent=1 // pred_check
      _
    $region19: #{tpu_custom_call.1} parent=1 // pred_check_branch
      %41 = sbr.rel (0) target = $region21
    $region20: #{tpu_custom_call.1} parent=1 // pred_region
      %42 = dma.done [#allocation3], 4096
    $region21: #{tpu_custom_call.1} parent=1 // pred_fallthru
      _
    // Predicated region
    $region22: #{tpu_custom_call.1} parent=1 // pred_check
      _
    $region23: #{tpu_custom_call.1} parent=1 // pred_check_branch
      %44 = sbr.rel (0) target = $region25
    $region24: #{tpu_custom_call.1} parent=1 // pred_region
      %45 = dma.done [#allocation6], 2048
    $region25: #{tpu_custom_call.1} parent=1 // pred_fallthru
      _
    %v47 = vld [vmem:[#allocation2] sm:$0xff]
    %v48 = vld [vmem:[#allocation2 + $0x8] sm:$0xff]
    %v49 = vld [vmem:[#allocation2 + $0x10] sm:$0xff]
    %v50 = vld [vmem:[#allocation2 + $0x18] sm:$0xff]
    %v51 = vld [vmem:[#allocation2 + $0x20] sm:$0xff]
    %v52 = vld [vmem:[#allocation2 + $0x28] sm:$0xff]
    %v53 = vld [vmem:[#allocation2 + $0x30] sm:$0xff]
    %v54 = vld [vmem:[#allocation2 + $0x38] sm:$0xff]
    %v55 = vld [vmem:[#allocation2 + $0x40] sm:$0xff]
    %v56 = vld [vmem:[#allocation2 + $0x48] sm:$0xff]
    %v57 = vld [vmem:[#allocation2 + $0x50] sm:$0xff]
    %v58 = vld [vmem:[#allocation2 + $0x58] sm:$0xff]
    %v59 = vld [vmem:[#allocation2 + $0x60] sm:$0xff]
    %v60 = vld [vmem:[#allocation2 + $0x68] sm:$0xff]
    %v61 = vld [vmem:[#allocation2 + $0x70] sm:$0xff]
    %v62 = vld [vmem:[#allocation2 + $0x78] sm:$0xff]
    %v63 = vld [vmem:[#allocation2 + $0x80] sm:$0xff]
    %v64 = vld [vmem:[#allocation2 + $0x88] sm:$0xff]
    %v65 = vld [vmem:[#allocation2 + $0x90] sm:$0xff]
    %v66 = vld [vmem:[#allocation2 + $0x98] sm:$0xff]
    %v67 = vld [vmem:[#allocation2 + $0xa0] sm:$0xff]
    %v68 = vld [vmem:[#allocation2 + $0xa8] sm:$0xff]
    %v69 = vld [vmem:[#allocation2 + $0xb0] sm:$0xff]
    %v70 = vld [vmem:[#allocation2 + $0xb8] sm:$0xff]
    %v71 = vld [vmem:[#allocation2 + $0xc0] sm:$0xff]
    %v72 = vld [vmem:[#allocation2 + $0xc8] sm:$0xff]
    %v73 = vld [vmem:[#allocation2 + $0xd0] sm:$0xff]
    %v74 = vld [vmem:[#allocation2 + $0xd8] sm:$0xff]
    %v75 = vld [vmem:[#allocation2 + $0xe0] sm:$0xff]
    %v76 = vld [vmem:[#allocation2 + $0xe8] sm:$0xff]
    %v77 = vld [vmem:[#allocation2 + $0xf0] sm:$0xff]
    %v78 = vld [vmem:[#allocation2 + $0xf8] sm:$0xff]
    %v79 = vld [vmem:[#allocation5] sm:$0xf]
    %v80 = vld [vmem:[#allocation5 + $0x4] sm:$0xf]
    %v81 = vld [vmem:[#allocation5 + $0x8] sm:$0xf]
    %v82 = vld [vmem:[#allocation5 + $0xc] sm:$0xf]
    %v83 = vld [vmem:[#allocation5 + $0x10] sm:$0xf]
    %v84 = vld [vmem:[#allocation5 + $0x14] sm:$0xf]
    %v85 = vld [vmem:[#allocation5 + $0x18] sm:$0xf]
    %v86 = vld [vmem:[#allocation5 + $0x1c] sm:$0xf]
    %v87 = vld [vmem:[#allocation5 + $0x20] sm:$0xf]
    %v88 = vld [vmem:[#allocation5 + $0x24] sm:$0xf]
    %v89 = vld [vmem:[#allocation5 + $0x28] sm:$0xf]
    %v90 = vld [vmem:[#allocation5 + $0x2c] sm:$0xf]
    %v91 = vld [vmem:[#allocation5 + $0x30] sm:$0xf]
    %v92 = vld [vmem:[#allocation5 + $0x34] sm:$0xf]
    %v93 = vld [vmem:[#allocation5 + $0x38] sm:$0xf]
    %v94 = vld [vmem:[#allocation5 + $0x3c] sm:$0xf]
    %v95 = vld [vmem:[#allocation5 + $0x40] sm:$0xf]
    %v96 = vld [vmem:[#allocation5 + $0x44] sm:$0xf]
    %v97 = vld [vmem:[#allocation5 + $0x48] sm:$0xf]
    %v98 = vld [vmem:[#allocation5 + $0x4c] sm:$0xf]
    %v99 = vld [vmem:[#allocation5 + $0x50] sm:$0xf]
    %v100 = vld [vmem:[#allocation5 + $0x54] sm:$0xf]
    %v101 = vld [vmem:[#allocation5 + $0x58] sm:$0xf]
    %v102 = vld [vmem:[#allocation5 + $0x5c] sm:$0xf]
    %v103 = vld [vmem:[#allocation5 + $0x60] sm:$0xf]
    %v104 = vld [vmem:[#allocation5 + $0x64] sm:$0xf]
    %v105 = vld [vmem:[#allocation5 + $0x68] sm:$0xf]
    %v106 = vld [vmem:[#allocation5 + $0x6c] sm:$0xf]
    %v107 = vld [vmem:[#allocation5 + $0x70] sm:$0xf]
    %v108 = vld [vmem:[#allocation5 + $0x74] sm:$0xf]
    %v109 = vld [vmem:[#allocation5 + $0x78] sm:$0xf]
    %v110 = vld [vmem:[#allocation5 + $0x7c] sm:$0xf]
    %v143 = vunpack.c.l.b16 %v47
    %v144 = vunpack.c.h.b16 %v47
    %v145 = vunpack.c.l.b16 %v48
    %v146 = vunpack.c.h.b16 %v48
    %v147 = vunpack.c.l.b16 %v49
    %v148 = vunpack.c.h.b16 %v49
    %v149 = vunpack.c.l.b16 %v50
    %v150 = vunpack.c.h.b16 %v50
    %v151 = vunpack.c.l.b16 %v51
    %v152 = vunpack.c.h.b16 %v51
    %v153 = vunpack.c.l.b16 %v52
    %v154 = vunpack.c.h.b16 %v52
    %v155 = vunpack.c.l.b16 %v53
    %v156 = vunpack.c.h.b16 %v53
    %v157 = vunpack.c.l.b16 %v54
    %v158 = vunpack.c.h.b16 %v54
    %v159 = vunpack.c.l.b16 %v55
    %v160 = vunpack.c.h.b16 %v55
    %v161 = vunpack.c.l.b16 %v56
    %v162 = vunpack.c.h.b16 %v56
    %v163 = vunpack.c.l.b16 %v57
    %v164 = vunpack.c.h.b16 %v57
    %v165 = vunpack.c.l.b16 %v58
    %v166 = vunpack.c.h.b16 %v58
    %v167 = vunpack.c.l.b16 %v59
    %v168 = vunpack.c.h.b16 %v59
    %v169 = vunpack.c.l.b16 %v60
    %v170 = vunpack.c.h.b16 %v60
    %v171 = vunpack.c.l.b16 %v61
    %v172 = vunpack.c.h.b16 %v61
    %v173 = vunpack.c.l.b16 %v62
    %v174 = vunpack.c.h.b16 %v62
    %v175 = vunpack.c.l.b16 %v63
    %v176 = vunpack.c.h.b16 %v63
    %v177 = vunpack.c.l.b16 %v64
    %v178 = vunpack.c.h.b16 %v64
    %v179 = vunpack.c.l.b16 %v65
    %v180 = vunpack.c.h.b16 %v65
    %v181 = vunpack.c.l.b16 %v66
    %v182 = vunpack.c.h.b16 %v66
    %v183 = vunpack.c.l.b16 %v67
    %v184 = vunpack.c.h.b16 %v67
    %v185 = vunpack.c.l.b16 %v68
    %v186 = vunpack.c.h.b16 %v68
    %v187 = vunpack.c.l.b16 %v69
    %v188 = vunpack.c.h.b16 %v69
    %v189 = vunpack.c.l.b16 %v70
    %v190 = vunpack.c.h.b16 %v70
    %v191 = vunpack.c.l.b16 %v71
    %v192 = vunpack.c.h.b16 %v71
    %v193 = vunpack.c.l.b16 %v72
    %v194 = vunpack.c.h.b16 %v72
    %v195 = vunpack.c.l.b16 %v73
    %v196 = vunpack.c.h.b16 %v73
    %v197 = vunpack.c.l.b16 %v74
    %v198 = vunpack.c.h.b16 %v74
    %v199 = vunpack.c.l.b16 %v75
    %v200 = vunpack.c.h.b16 %v75
    %v201 = vunpack.c.l.b16 %v76
    %v202 = vunpack.c.h.b16 %v76
    %v203 = vunpack.c.l.b16 %v77
    %v204 = vunpack.c.h.b16 %v77
    %v205 = vunpack.c.l.b16 %v78
    %v206 = vunpack.c.h.b16 %v78
    %v207 = vpack.c.b16 %v145, %v143
    %v208 = vpack.c.b16 %v146, %v144
    %v209 = vpack.c.b16 %v149, %v147
    %v210 = vpack.c.b16 %v150, %v148
    %v211 = vpack.c.b16 %v153, %v151
    %v212 = vpack.c.b16 %v154, %v152
    %v213 = vpack.c.b16 %v157, %v155
    %v214 = vpack.c.b16 %v158, %v156
    %v215 = vpack.c.b16 %v161, %v159
    %v216 = vpack.c.b16 %v162, %v160
    %v217 = vpack.c.b16 %v165, %v163
    %v218 = vpack.c.b16 %v166, %v164
    %v219 = vpack.c.b16 %v169, %v167
    %v220 = vpack.c.b16 %v170, %v168
    %v221 = vpack.c.b16 %v173, %v171
    %v222 = vpack.c.b16 %v174, %v172
    %v223 = vpack.c.b16 %v177, %v175
    %v224 = vpack.c.b16 %v178, %v176
    %v225 = vpack.c.b16 %v181, %v179
    %v226 = vpack.c.b16 %v182, %v180
    %v227 = vpack.c.b16 %v185, %v183
    %v228 = vpack.c.b16 %v186, %v184
    %v229 = vpack.c.b16 %v189, %v187
    %v230 = vpack.c.b16 %v190, %v188
    %v231 = vpack.c.b16 %v193, %v191
    %v232 = vpack.c.b16 %v194, %v192
    %v233 = vpack.c.b16 %v197, %v195
    %v234 = vpack.c.b16 %v198, %v196
    %v235 = vpack.c.b16 %v201, %v199
    %v236 = vpack.c.b16 %v202, %v200
    %v237 = vpack.c.b16 %v205, %v203
    %v238 = vpack.c.b16 %v206, %v204
    %v303 = vunpack.c.l.b16 %v79
    %v304 = vunpack.c.l.b16 %v80
    %v305 = vunpack.c.l.b16 %v81
    %v306 = vunpack.c.l.b16 %v82
    %v307 = vunpack.c.l.b16 %v83
    %v308 = vunpack.c.l.b16 %v84
    %v309 = vunpack.c.l.b16 %v85
    %v310 = vunpack.c.l.b16 %v86
    %v311 = vunpack.c.l.b16 %v87
    %v312 = vunpack.c.l.b16 %v88
    %v313 = vunpack.c.l.b16 %v89
    %v314 = vunpack.c.l.b16 %v90
    %v315 = vunpack.c.l.b16 %v91
    %v316 = vunpack.c.l.b16 %v92
    %v317 = vunpack.c.l.b16 %v93
    %v318 = vunpack.c.l.b16 %v94
    %v319 = vunpack.c.l.b16 %v95
    %v320 = vunpack.c.l.b16 %v96
    %v321 = vunpack.c.l.b16 %v97
    %v322 = vunpack.c.l.b16 %v98
    %v323 = vunpack.c.l.b16 %v99
    %v324 = vunpack.c.l.b16 %v100
    %v325 = vunpack.c.l.b16 %v101
    %v326 = vunpack.c.l.b16 %v102
    %v327 = vunpack.c.l.b16 %v103
    %v328 = vunpack.c.l.b16 %v104
    %v329 = vunpack.c.l.b16 %v105
    %v330 = vunpack.c.l.b16 %v106
    %v331 = vunpack.c.l.b16 %v107
    %v332 = vunpack.c.l.b16 %v108
    %v333 = vunpack.c.l.b16 %v109
    %v334 = vunpack.c.l.b16 %v110
    %v335 = vpack.c.b16 %v304, %v303
    %v336 = vpack.c.b16 %v306, %v305
    %v337 = vpack.c.b16 %v308, %v307
    %v338 = vpack.c.b16 %v310, %v309
    %v339 = vpack.c.b16 %v312, %v311
    %v340 = vpack.c.b16 %v314, %v313
    %v341 = vpack.c.b16 %v316, %v315
    %v342 = vpack.c.b16 %v318, %v317
    %v343 = vpack.c.b16 %v320, %v319
    %v344 = vpack.c.b16 %v322, %v321
    %v345 = vpack.c.b16 %v324, %v323
    %v346 = vpack.c.b16 %v326, %v325
    %v347 = vpack.c.b16 %v328, %v327
    %v348 = vpack.c.b16 %v330, %v329
    %v349 = vpack.c.b16 %v332, %v331
    %v350 = vpack.c.b16 %v334, %v333
    %367 = vmatprep.subr.bf16.mxu0 0
    %368 = vmatpush1.bf16.msra.mxu0 %v335
    %369 = vmatprep.subr.bf16.mxu0 0
    %370 = vmatpush1.bf16.msra.mxu0 %v336
    %371 = vmatprep.subr.bf16.mxu0 0
    %372 = vmatpush1.bf16.msra.mxu0 %v337
    %373 = vmatprep.subr.bf16.mxu0 0
    %374 = vmatpush1.bf16.msra.mxu0 %v338
    %375 = vmatprep.subr.bf16.mxu0 0
    %376 = vmatpush1.bf16.msra.mxu0 %v339
    %377 = vmatprep.subr.bf16.mxu0 0
    %378 = vmatpush1.bf16.msra.mxu0 %v340
    %379 = vmatprep.subr.bf16.mxu0 0
    %380 = vmatpush1.bf16.msra.mxu0 %v341
    %381 = vmatprep.subr.bf16.mxu0 0
    %382 = vmatpush1.bf16.msra.mxu0 %v342
    %383 = vmatprep.subr.bf16.mxu0 0
    %384 = vmatpush1.bf16.msra.mxu0 %v343
    %385 = vmatprep.subr.bf16.mxu0 0
    %386 = vmatpush1.bf16.msra.mxu0 %v344
    %387 = vmatprep.subr.bf16.mxu0 0
    %388 = vmatpush1.bf16.msra.mxu0 %v345
    %389 = vmatprep.subr.bf16.mxu0 0
    %390 = vmatpush1.bf16.msra.mxu0 %v346
    %391 = vmatprep.subr.bf16.mxu0 0
    %392 = vmatpush1.bf16.msra.mxu0 %v347
    %393 = vmatprep.subr.bf16.mxu0 0
    %394 = vmatpush1.bf16.msra.mxu0 %v348
    %395 = vmatprep.subr.bf16.mxu0 0
    %396 = vmatpush1.bf16.msra.mxu0 %v349
    %397 = vmatprep.subr.bf16.mxu0 0
    %398 = vmatpush1.bf16.msra.mxu0 %v350
    %399 = vmatprep.mubr.bf16.mxu0 %v208
    %400 = vmatmul.mubr.bf16.gmra.mrb[0].mxu0 %v207
    %v401 = vpop.f32.mrb[0].mxu0
    %v402 = vadd.f32 0.0, %v401
    %v403 = vpop.f32.mrb[0].mxu0
    %v404 = vpop.f32.mrb[0].mxu0
    %v405 = vadd.f32 0.0, %v404
    %v406 = vpop.f32.mrb[0].mxu0
    %407 = vmatprep.mubr.bf16.mxu0 %v210
    %408 = vmatmul.mubr.bf16.gmra.mrb[0].mxu0 %v209
    %v409 = vpop.f32.mrb[0].mxu0
    %v410 = vadd.f32 0.0, %v409
    %v411 = vpop.f32.mrb[0].mxu0
    %v412 = vpop.f32.mrb[0].mxu0
    %v413 = vadd.f32 0.0, %v412
    %v414 = vpop.f32.mrb[0].mxu0
    %415 = vmatprep.mubr.bf16.mxu0 %v212
    %416 = vmatmul.mubr.bf16.gmra.mrb[0].mxu0 %v211
    %v417 = vpop.f32.mrb[0].mxu0
    %v418 = vadd.f32 0.0, %v417
    %v419 = vpop.f32.mrb[0].mxu0
    %v420 = vpop.f32.mrb[0].mxu0
    %v421 = vadd.f32 0.0, %v420
    %v422 = vpop.f32.mrb[0].mxu0
    %423 = vmatprep.mubr.bf16.mxu0 %v214
    %424 = vmatmul.mubr.bf16.gmra.mrb[0].mxu0 %v213
    %v425 = vpop.f32.mrb[0].mxu0
    %v426 = vadd.f32 0.0, %v425
    %v427 = vpop.f32.mrb[0].mxu0
    %v428 = vpop.f32.mrb[0].mxu0
    %v429 = vadd.f32 0.0, %v428
    %v430 = vpop.f32.mrb[0].mxu0
    %431 = vmatprep.mubr.bf16.mxu0 %v216
    %432 = vmatmul.mubr.bf16.gmra.mrb[0].mxu0 %v215
    %v433 = vpop.f32.mrb[0].mxu0
    %v434 = vadd.f32 0.0, %v433
    %v435 = vpop.f32.mrb[0].mxu0
    %v436 = vpop.f32.mrb[0].mxu0
    %v437 = vadd.f32 0.0, %v436
    %v438 = vpop.f32.mrb[0].mxu0
    %439 = vmatprep.mubr.bf16.mxu0 %v218
    %440 = vmatmul.mubr.bf16.gmra.mrb[0].mxu0 %v217
    %v441 = vpop.f32.mrb[0].mxu0
    %v442 = vadd.f32 0.0, %v441
    %v443 = vpop.f32.mrb[0].mxu0
    %v444 = vpop.f32.mrb[0].mxu0
    %v445 = vadd.f32 0.0, %v444
    %v446 = vpop.f32.mrb[0].mxu0
    %447 = vmatprep.mubr.bf16.mxu0 %v220
    %448 = vmatmul.mubr.bf16.gmra.mrb[0].mxu0 %v219
    %v449 = vpop.f32.mrb[0].mxu0
    %v450 = vadd.f32 0.0, %v449
    %v451 = vpop.f32.mrb[0].mxu0
    %v452 = vpop.f32.mrb[0].mxu0
    %v453 = vadd.f32 0.0, %v452
    %v454 = vpop.f32.mrb[0].mxu0
    %455 = vmatprep.mubr.bf16.mxu0 %v222
    %456 = vmatmul.mubr.bf16.gmra.mrb[0].mxu0 %v221
    %v457 = vpop.f32.mrb[0].mxu0
    %v458 = vadd.f32 0.0, %v457
    %v459 = vpop.f32.mrb[0].mxu0
    %v460 = vpop.f32.mrb[0].mxu0
    %v461 = vadd.f32 0.0, %v460
    %v462 = vpop.f32.mrb[0].mxu0
    %463 = vmatprep.mubr.bf16.mxu0 %v224
    %464 = vmatmul.mubr.bf16.gmra.mrb[0].mxu0 %v223
    %v465 = vpop.f32.mrb[0].mxu0
    %v466 = vadd.f32 0.0, %v465
    %v467 = vpop.f32.mrb[0].mxu0
    %v468 = vpop.f32.mrb[0].mxu0
    %v469 = vadd.f32 0.0, %v468
    %v470 = vpop.f32.mrb[0].mxu0
    %471 = vmatprep.mubr.bf16.mxu0 %v226
    %472 = vmatmul.mubr.bf16.gmra.mrb[0].mxu0 %v225
    %v473 = vpop.f32.mrb[0].mxu0
    %v474 = vadd.f32 0.0, %v473
    %v475 = vpop.f32.mrb[0].mxu0
    %v476 = vpop.f32.mrb[0].mxu0
    %v477 = vadd.f32 0.0, %v476
    %v478 = vpop.f32.mrb[0].mxu0
    %479 = vmatprep.mubr.bf16.mxu0 %v228
    %480 = vmatmul.mubr.bf16.gmra.mrb[0].mxu0 %v227
    %v481 = vpop.f32.mrb[0].mxu0
    %v482 = vadd.f32 0.0, %v481
    %v483 = vpop.f32.mrb[0].mxu0
    %v484 = vpop.f32.mrb[0].mxu0
    %v485 = vadd.f32 0.0, %v484
    %v486 = vpop.f32.mrb[0].mxu0
    %487 = vmatprep.mubr.bf16.mxu0 %v230
    %488 = vmatmul.mubr.bf16.gmra.mrb[0].mxu0 %v229
    %v489 = vpop.f32.mrb[0].mxu0
    %v490 = vadd.f32 0.0, %v489
    %v491 = vpop.f32.mrb[0].mxu0
    %v492 = vpop.f32.mrb[0].mxu0
    %v493 = vadd.f32 0.0, %v492
    %v494 = vpop.f32.mrb[0].mxu0
    %495 = vmatprep.mubr.bf16.mxu0 %v232
    %496 = vmatmul.mubr.bf16.gmra.mrb[0].mxu0 %v231
    %v497 = vpop.f32.mrb[0].mxu0
    %v498 = vadd.f32 0.0, %v497
    %v499 = vpop.f32.mrb[0].mxu0
    %v500 = vpop.f32.mrb[0].mxu0
    %v501 = vadd.f32 0.0, %v500
    %v502 = vpop.f32.mrb[0].mxu0
    %503 = vmatprep.mubr.bf16.mxu0 %v234
    %504 = vmatmul.mubr.bf16.gmra.mrb[0].mxu0 %v233
    %v505 = vpop.f32.mrb[0].mxu0
    %v506 = vadd.f32 0.0, %v505
    %v507 = vpop.f32.mrb[0].mxu0
    %v508 = vpop.f32.mrb[0].mxu0
    %v509 = vadd.f32 0.0, %v508
    %v510 = vpop.f32.mrb[0].mxu0
    %511 = vmatprep.mubr.bf16.mxu0 %v236
    %512 = vmatmul.mubr.bf16.gmra.mrb[0].mxu0 %v235
    %v513 = vpop.f32.mrb[0].mxu0
    %v514 = vadd.f32 0.0, %v513
    %v515 = vpop.f32.mrb[0].mxu0
    %v516 = vpop.f32.mrb[0].mxu0
    %v517 = vadd.f32 0.0, %v516
    %v518 = vpop.f32.mrb[0].mxu0
    %519 = vmatprep.mubr.bf16.mxu0 %v238
    %520 = vmatmul.mubr.bf16.gmra.mrb[0].mxu0 %v237
    %v521 = vpop.f32.mrb[0].mxu0
    %v522 = vpop.f32.mrb[0].mxu0
    %v523 = vpop.f32.mrb[0].mxu0
    %v524 = vpop.f32.mrb[0].mxu0
    %525 = vdwg.mxu0
    %v526 = vmax.f32 %v402, %v405
    %v527 = vmax.f32 %v410, %v413
    %v528 = vmax.f32 %v418, %v421
    %v529 = vmax.f32 %v426, %v429
    %v530 = vmax.f32 %v434, %v437
    %v531 = vmax.f32 %v442, %v445
    %v532 = vmax.f32 %v450, %v453
    %v533 = vmax.f32 %v458, %v461
    %v534 = vmax.f32 %v466, %v469
    %v535 = vmax.f32 %v474, %v477
    %v536 = vmax.f32 %v482, %v485
    %v537 = vmax.f32 %v490, %v493
    %v538 = vmax.f32 %v498, %v501
    %v539 = vmax.f32 %v506, %v509
    %v540 = vmax.f32 %v514, %v517
    %v556 = vrot.slane %v402, 1
    %v557 = vrot.slane %v410, 1
    %v558 = vrot.slane %v418, 1
    %v559 = vrot.slane %v426, 1
    %v560 = vrot.slane %v434, 1
    %v561 = vrot.slane %v442, 1
    %v562 = vrot.slane %v450, 1
    %v563 = vrot.slane %v458, 1
    %v564 = vrot.slane %v466, 1
    %v565 = vrot.slane %v474, 1
    %v566 = vrot.slane %v482, 1
    %v567 = vrot.slane %v490, 1
    %v568 = vrot.slane %v498, 1
    %v569 = vrot.slane %v506, 1
    %v570 = vrot.slane %v514, 1
    %v586 = vmax.f32 %v526, %v556
    %v587 = vmax.f32 %v527, %v557
    %v588 = vmax.f32 %v528, %v558
    %v589 = vmax.f32 %v529, %v559
    %v590 = vmax.f32 %v530, %v560
    %v591 = vmax.f32 %v531, %v561
    %v592 = vmax.f32 %v532, %v562
    %v593 = vmax.f32 %v533, %v563
    %v594 = vmax.f32 %v534, %v564
    %v595 = vmax.f32 %v535, %v565
    %v596 = vmax.f32 %v536, %v566
    %v597 = vmax.f32 %v537, %v567
    %v598 = vmax.f32 %v538, %v568
    %v599 = vmax.f32 %v539, %v569
    %v600 = vmax.f32 %v540, %v570
    %v601 = vmax.f32 %v586, %v594
    %v602 = vmax.f32 %v587, %v595
    %v603 = vmax.f32 %v588, %v596
    %v604 = vmax.f32 %v589, %v597
    %v605 = vmax.f32 %v590, %v598
    %v606 = vmax.f32 %v591, %v599
    %v607 = vmax.f32 %v592, %v600
    %v608 = vmax.f32 %v601, %v587
    %v609 = vmax.f32 %v602, %v588
    %v610 = vmax.f32 %v603, %v589
    %v611 = vmax.f32 %v604, %v590
    %v612 = vmax.f32 %v605, %v591
    %v613 = vmax.f32 %v606, %v592
    %v614 = vmax.f32 %v607, %v593
    %vm615 = vcmask 1046528
    %v616 = vsel %vm615, %v608, 0.0
    %v617 = vsel %vm615, %v609, 0.0
    %v618 = vadd.f32 %v616, %v617
    %v619 = vsel %vm615, %v610, 0.0
    %v620 = vadd.f32 %v618, %v619
    %v621 = vsel %vm615, %v611, 0.0
    %v622 = vadd.f32 %v620, %v621
    %v623 = vsel %vm615, %v612, 0.0
    %v624 = vadd.f32 %v622, %v623
    %v625 = vsel %vm615, %v613, 0.0
    %v626 = vadd.f32 %v624, %v625
    %v627 = vsel %vm615, %v614, 0.0
    %v628 = vadd.f32 %v626, %v627
    %v629 = vrot.slane %v628, 4
    %v630 = vadd.f32 %v628, %v629
    %v631 = vrot.slane %v630, 2
    %v632 = vadd.f32 %v630, %v631
    %v633 = vrot.slane %v632, 1
    %v634 = vadd.f32 %v632, %v633
    %v635 = vmul.f32 %v608, %v608
    %v636 = vmul.f32 %v609, %v609
    %v637 = vmul.f32 %v610, %v610
    %v638 = vmul.f32 %v611, %v611
    %v639 = vmul.f32 %v612, %v612
    %v640 = vmul.f32 %v613, %v613
    %v641 = vmul.f32 %v614, %v614
    %v642 = vsel %vm615, %v635, 0.0
    %v643 = vsel %vm615, %v636, 0.0
    %v644 = vadd.f32 %v642, %v643
    %v645 = vsel %vm615, %v637, 0.0
    %v646 = vadd.f32 %v644, %v645
    %v647 = vsel %vm615, %v638, 0.0
    %v648 = vadd.f32 %v646, %v647
    %v649 = vsel %vm615, %v639, 0.0
    %v650 = vadd.f32 %v648, %v649
    %v651 = vsel %vm615, %v640, 0.0
    %v652 = vadd.f32 %v650, %v651
    %v653 = vsel %vm615, %v641, 0.0
    %v654 = vadd.f32 %v652, %v653
    %v655 = vrot.slane %v654, 4
    %v656 = vadd.f32 %v654, %v655
    %v657 = vrot.slane %v656, 2
    %v658 = vadd.f32 %v656, %v657
    %v659 = vrot.slane %v658, 1
    %v660 = vadd.f32 %v658, %v659
    %662 = vrot.lane.b32.xlu0 %v634, 64
    %v663 = vpop.permute.xlu0 %662
    %v665 = vadd.f32 %v634, %v663
    %667 = vrot.lane.b32.xlu0 %v660, 64
    %v668 = vpop.permute.xlu0 %667
    %v670 = vadd.f32 %v660, %v668
    %v671 = vrcp.pop 98.0
    %v672 = vmul.f32 %v665, %v671
    %v673 = vmul.f32 %v670, %v671
    %v674 = vmul.f32 %v672, %v672
    %v675 = vsub.f32 %v673, %v674
    %v676 = vadd.f32 %v675, 1e-05
    %v677 = vrsqrt.pop %v676
    %v678 = vld [vmem:[%s2] sm:$0x1]
    %v679 = vld [vmem:[%s3] sm:$0x1]
    %v680 = vmul.f32 %v677, %v678
    %v681 = vmul.f32 %v672, %v680
    %v682 = vsub.f32 %v679, %v681
    %684 = vrot.lane.b32.xlu0 %v680, 64
    %v685 = vpop.permute.xlu0 %684
    %vm687 = vcmask 523264
    %v688 = vsel %vm687, %v680, %v685
    %v690 = vlaneseq
    %v691 = vshrl.u32 %v690, 7
    %v692 = vsub.s32 0, %v691
    %v693 = vrot.slane %v682, %v692
    %694 = vrot.lane.b32.xlu0 %v693, 64
    %v695 = vpop.permute.xlu0 %694
    %v697 = vsel %vm687, %v682, %v695
    %v698 = vlaneseq
    %v699 = vshrl.u32 %v698, 7
    %v700 = vsub.s32 0, %v699
    %v701 = vrot.slane %v688, %v700
    %v702 = vmul.f32 %v608, %v701
    %v703 = vmul.f32 %v609, %v701
    %v704 = vmul.f32 %v610, %v701
    %v705 = vmul.f32 %v611, %v701
    %v706 = vmul.f32 %v612, %v701
    %v707 = vmul.f32 %v613, %v701
    %v708 = vmul.f32 %v614, %v701
    %v709 = vlaneseq
    %v710 = vshrl.u32 %v709, 7
    %v711 = vsub.s32 0, %v710
    %v712 = vrot.slane %v697, %v711
    %v713 = vadd.f32 %v702, %v712
    %v714 = vadd.f32 %v703, %v712
    %v715 = vadd.f32 %v704, %v712
    %v716 = vadd.f32 %v705, %v712
    %v717 = vadd.f32 %v706, %v712
    %v718 = vadd.f32 %v707, %v712
    %v719 = vadd.f32 %v708, %v712
    %720 = vst [vmem:[#allocation7] sm:$0x7f] %v713
    %721 = vst [vmem:[#allocation7 + $0x8] sm:$0x7f] %v714
    %722 = vst [vmem:[#allocation7 + $0x10] sm:$0x7f] %v715
    %723 = vst [vmem:[#allocation7 + $0x18] sm:$0x7f] %v716
    %724 = vst [vmem:[#allocation7 + $0x20] sm:$0x7f] %v717
    %725 = vst [vmem:[#allocation7 + $0x28] sm:$0x7f] %v718
    %726 = vst [vmem:[#allocation7 + $0x30] sm:$0x7f] %v719
    // Predicated region
    $region26: #{tpu_custom_call.1} parent=1 // pred_check
      _
    $region27: #{tpu_custom_call.1} parent=1 // pred_check_branch
      %728 = sbr.rel (0) target = $region29
    $region28: #{tpu_custom_call.1} parent=1 // pred_region
      %s730 = ssub.s32 896, 896
      %731 = vsyncadd [#allocation4], %s730
      %s732 = sshll.u32 [#allocation7], 4
      %s733 = int_to_ptr.vmem [resolvable:$true] %s732
      %738 = dma.vmem_to_hbm [thread:$0]  %s733, 896, %s4, [#allocation4], 128, 128, 8
    $region29: #{tpu_custom_call.1} parent=1 // pred_fallthru
      _
    // Predicated region
    $region30: #{tpu_custom_call.1} parent=1 // pred_check
      _
    $region31: #{tpu_custom_call.1} parent=1 // pred_check_branch
      %740 = sbr.rel (0) target = $region33
    $region32: #{tpu_custom_call.1} parent=1 // pred_region
      %741 = dma.done [#allocation4], 896
    $region33: #{tpu_custom_call.1} parent=1 // pred_fallthru
      _
    %742 = vsyncpa [#allocation3], 1
    %743 = vsyncpa [#allocation6], 1
    %744 = vsyncpa [#allocation4], 1

</llo_original>
